<compile_context>
chip_gen: v6e
topology: v6e:2x2x1
jax: 0.10.0
libtpu: 0.0.40
codegen_flags: <defaults>
</compile_context>

<pallas_src>
import jax
import jax.numpy as jnp
from jax import lax
from jax.experimental import pallas as pl
from jax.experimental.pallas import tpu as pltpu


def _round_up(x: int, m: int) -> int:
    return ((x + m - 1) // m) * m


def _make_triplet_loss_kernel(margin: float, eps: float, batch: int):
    inv_2b = 0.5 / float(batch)   # folds mean(.)·0.5 into one static multiply
    eps2 = eps * eps

    def kernel(pos_ref, img_ref, neg_ref, out_ref, pos_acc, neg_acc):
        i = pl.program_id(0)
        n = pl.num_programs(0)

        @pl.when(i == 0)
        def _init():
            pos_acc[...] = jnp.zeros_like(pos_acc)
            neg_acc[...] = jnp.zeros_like(neg_acc)

        # Per-tile cast (inputs may arrive as bf16); working precision is f32.
        pos = pos_ref[...].astype(jnp.float32)
        img = img_ref[...].astype(jnp.float32)
        neg = neg_ref[...].astype(jnp.float32)

        tb = pos.shape[0]
        # Global row ids for tail-tile masking (padded rows excluded from sums).
        row = i * tb + lax.broadcasted_iota(jnp.int32, (tb, 1), 0)
        valid = row < batch

        # Row-wise reductions over the feature axis D (VPU mul + XLU reduce —
        # deliberately NOT routed through the MXU).
        pos_dot = jnp.sum(pos * img, axis=1, keepdims=True)      # (TB, 1)
        neg_dot = jnp.sum(neg * img, axis=1, keepdims=True)
        pos_ssq = jnp.sum(pos * pos, axis=1, keepdims=True)
        img_ssq = jnp.sum(img * img, axis=1, keepdims=True)
        neg_ssq = jnp.sum(neg * neg, axis=1, keepdims=True)

        # 1 / max(||x||, eps) == rsqrt(max(||x||^2, eps^2))  (ssq >= 0)
        inv_img = lax.rsqrt(jnp.maximum(img_ssq, eps2))
        pos_cos = pos_dot * lax.rsqrt(jnp.maximum(pos_ssq, eps2)) * inv_img
        neg_cos = neg_dot * lax.rsqrt(jnp.maximum(neg_ssq, eps2)) * inv_img

        pos_dist = 1.0 - pos_cos
        neg_dist = 1.0 - neg_cos

        pos_sq = pos_dist * pos_dist
        neg_hinge = jnp.maximum(margin - neg_dist * neg_dist, 0.0)

        pos_acc[...] += jnp.sum(jnp.where(valid, pos_sq, 0.0), keepdims=True)
        neg_acc[...] += jnp.sum(jnp.where(valid, neg_hinge, 0.0), keepdims=True)

        @pl.when(i == n - 1)
        def _finalize():
            out_ref[...] = ((pos_acc[...] + neg_acc[...]) * inv_2b).astype(
                jnp.float32)

    return kernel


def _pick_tile_b(batch: int, feat: int, itemsize: int) -> int:
    """Largest batch tile that keeps double-buffered inputs + f32 working
    copies within a conservative ~20 MiB VMEM budget (safe on v5e/v6e/v7x)."""
    budget_bytes = 20 * (1 << 20)
    # 3 inputs x (2 pipeline buffers x input dtype + 1 f32 compute copy) per row
    per_row = 3 * feat * (2 * itemsize + 4)
    tb = budget_bytes // max(per_row, 1)
    tb = max(8, (tb // 8) * 8)          # sublane-aligned
    tb = min(tb, 2048)                  # keep per-step work reasonable
    tb = min(tb, _round_up(batch, 8))   # no point tiling past the batch
    return max(8, (tb // 8) * 8)


def cross_modal_triplet_loss(pos_shape_feat, img_feat, neg_shape_feat,
                             margin: float = 0.2, eps: float = 1e-6,
                             tile_b: int | None = None):
    """Pallas implementation of Cross_Modal_Triplet_Loss.forward.

    Inputs are (B, D) feature matrices (f32 or bf16); returns a scalar f32 loss.
    """
    B, D = pos_shape_feat.shape
    assert img_feat.shape == (B, D) and neg_shape_feat.shape == (B, D)

    itemsize = max(jnp.dtype(x.dtype).itemsize
                   for x in (pos_shape_feat, img_feat, neg_shape_feat))
    if tile_b is None:
        tb = _pick_tile_b(B, D, itemsize)
    else:
        tb = max(8, (int(tile_b) // 8) * 8)

    grid = (pl.cdiv(B, tb),)
    kernel = _make_triplet_loss_kernel(float(margin), float(eps), B)

    tile_spec = pl.BlockSpec((tb, D), lambda i: (i, 0))

    out = pl.pallas_call(
        kernel,
        out_shape=jax.ShapeDtypeStruct((1, 1), jnp.float32),
        grid_spec=pltpu.PrefetchScalarGridSpec(
            num_scalar_prefetch=0,
            grid=grid,
            in_specs=[tile_spec, tile_spec, tile_spec],
            out_specs=pl.BlockSpec((1, 1), lambda i: (0, 0)),
            scratch_shapes=[pltpu.VMEM((1, 1), jnp.float32),
                            pltpu.VMEM((1, 1), jnp.float32)],
        ),
        compiler_params=pltpu.CompilerParams(
            dimension_semantics=("arbitrary",),   # accumulator axis
            vmem_limit_bytes=32 * 1024 * 1024,
        ),
    )(pos_shape_feat, img_feat, neg_shape_feat)
    return out[0, 0]


def _reference_loss(pos, img, neg, margin=0.2, eps=1e-6):
    """Plain-JAX reference mirroring the PyTorch module (for sanity check)."""
    def cos(a, b):
        dot = jnp.sum(a * b, axis=1)
        na = jnp.maximum(jnp.linalg.norm(a, axis=1), eps)
        nb = jnp.maximum(jnp.linalg.norm(b, axis=1), eps)
        return dot / (na * nb)

    pos_d = 1.0 - cos(pos, img)
    neg_d = 1.0 - cos(neg, img)
    return (jnp.mean(pos_d ** 2) * 0.5
            + jnp.mean(jnp.maximum(margin - neg_d ** 2, 0.0)) * 0.5)


if __name__ == "__main__":
    key = jax.random.PRNGKey(0)

    # Case 1: small lane-aligned example (single tile).
    B, D = 8, 128
    k1, k2, k3, k4, k5, k6 = jax.random.split(key, 6)
    pos_feat = jax.random.normal(k1, (B, D), dtype=jnp.float32)
    img_feat = jax.random.normal(k2, (B, D), dtype=jnp.float32)
    neg_feat = jax.random.normal(k3, (B, D), dtype=jnp.float32)

    loss = cross_modal_triplet_loss(pos_feat, img_feat, neg_feat)
    loss = jax.block_until_ready(loss)
    ref = _reference_loss(pos_feat, img_feat, neg_feat)
    assert jnp.allclose(loss, ref, rtol=1e-5, atol=1e-5), (loss, ref)

    # Case 2: multi-tile grid with a ragged tail (B=20, TB=8 -> 3 tiles,
    # last tile has 4 padded rows that must be masked out of the mean).
    B2, D2 = 20, 128
    pos2 = jax.random.normal(k4, (B2, D2), dtype=jnp.float32)
    img2 = jax.random.normal(k5, (B2, D2), dtype=jnp.float32)
    neg2 = jax.random.normal(k6, (B2, D2), dtype=jnp.float32)

    loss2 = cross_modal_triplet_loss(pos2, img2, neg2, tile_b=8)
    loss2 = jax.block_until_ready(loss2)
    ref2 = _reference_loss(pos2, img2, neg2)
    assert jnp.allclose(loss2, ref2, rtol=1e-5, atol=1e-5), (loss2, ref2)

    print("KERNEL_OK")
</pallas_src>

<mosaic_0001>
module attributes {stable_mosaic.version = 11 : i64} {
  func.func @kernel(%arg0: i32, %arg1: memref<8x128xf32, #tpu.memory_space<vmem>>, %arg2: memref<8x128xf32, #tpu.memory_space<vmem>>, %arg3: memref<8x128xf32, #tpu.memory_space<vmem>>, %arg4: memref<1x1xf32, #tpu.memory_space<vmem>>, %arg5: memref<1x1xf32, #tpu.memory_space<vmem>>, %arg6: memref<1x1xf32, #tpu.memory_space<vmem>>) attributes {dimension_semantics = [#tpu.dimension_semantics<arbitrary>], iteration_bounds = array<i64: 1>, scalar_prefetch = 0 : i64, scratch_operands = 2 : i64, tpu.core_type = #tpu.core_type<tc>, window_params = [{transform_indices = @transform_0, window_bounds = array<i64: 8, 128>}, {transform_indices = @transform_1, window_bounds = array<i64: 8, 128>}, {transform_indices = @transform_2, window_bounds = array<i64: 8, 128>}, {pipeline_mode = #tpu.pipeline_mode<synchronous>, transform_indices = @transform_3, window_bounds = array<i64: 1, 1>}]} {
    %c0_i32 = arith.constant 0 : i32
    %0 = arith.cmpi eq, %arg0, %c0_i32 : i32
    %1 = arith.extui %0 : i1 to i32
    %c0_i32_0 = arith.constant 0 : i32
    %2 = arith.cmpi ne, %1, %c0_i32_0 : i32
    scf.if %2 {
      %cst_32 = arith.constant 0.000000e+00 : f32
      %73 = vector.broadcast %cst_32 : f32 to vector<1x1xf32>
      %c0_33 = arith.constant 0 : index
      %c0_34 = arith.constant 0 : index
      %74 = vector.load %arg5[%c0_33, %c0_34] : memref<1x1xf32, #tpu.memory_space<vmem>>, vector<1x1xf32>
      tpu.vector_store %arg5[%c0_33, %c0_34], %73 {strides = array<i32>} : memref<1x1xf32, #tpu.memory_space<vmem>>, vector<1x1xf32>,
      %cst_35 = arith.constant 0.000000e+00 : f32
      %75 = vector.broadcast %cst_35 : f32 to vector<1x1xf32>
      %c0_36 = arith.constant 0 : index
      %c0_37 = arith.constant 0 : index
      %76 = vector.load %arg6[%c0_36, %c0_37] : memref<1x1xf32, #tpu.memory_space<vmem>>, vector<1x1xf32>
      tpu.vector_store %arg6[%c0_36, %c0_37], %75 {strides = array<i32>} : memref<1x1xf32, #tpu.memory_space<vmem>>, vector<1x1xf32>,
    } else {
    }
    %c0 = arith.constant 0 : index
    %c0_1 = arith.constant 0 : index
    %3 = vector.load %arg1[%c0, %c0_1] : memref<8x128xf32, #tpu.memory_space<vmem>>, vector<8x128xf32>
    %c0_2 = arith.constant 0 : index
    %c0_3 = arith.constant 0 : index
    %4 = vector.load %arg2[%c0_2, %c0_3] : memref<8x128xf32, #tpu.memory_space<vmem>>, vector<8x128xf32>
    %c0_4 = arith.constant 0 : index
    %c0_5 = arith.constant 0 : index
    %5 = vector.load %arg3[%c0_4, %c0_5] : memref<8x128xf32, #tpu.memory_space<vmem>>, vector<8x128xf32>
    %c8_i32 = arith.constant 8 : i32
    %6 = arith.muli %arg0, %c8_i32 : i32
    %7 = tpu.iota {dimensions = array<i32: 0>} : vector<8x1xi32>
    %8 = vector.broadcast %6 : i32 to vector<8x1xi32>
    %9 = arith.addi %8, %7 : vector<8x1xi32>
    %c8_i32_6 = arith.constant 8 : i32
    %10 = vector.broadcast %c8_i32_6 : i32 to vector<8x1xi32>
    %11 = arith.cmpi slt, %9, %10 : vector<8x1xi32>
    %12 = arith.mulf %3, %4 : vector<8x128xf32>
    %cst = arith.constant dense<0.000000e+00> : vector<8xf32>
    %13 = vector.multi_reduction <add>, %12, %cst [1] : vector<8x128xf32> to vector<8xf32>
    %14 = vector.shape_cast %13 : vector<8xf32> to vector<8x1xf32>
    %15 = arith.mulf %5, %4 : vector<8x128xf32>
    %cst_7 = arith.constant dense<0.000000e+00> : vector<8xf32>
    %16 = vector.multi_reduction <add>, %15, %cst_7 [1] : vector<8x128xf32> to vector<8xf32>
    %17 = vector.shape_cast %16 : vector<8xf32> to vector<8x1xf32>
    %18 = arith.mulf %3, %3 : vector<8x128xf32>
    %cst_8 = arith.constant dense<0.000000e+00> : vector<8xf32>
    %19 = vector.multi_reduction <add>, %18, %cst_8 [1] : vector<8x128xf32> to vector<8xf32>
    %20 = vector.shape_cast %19 : vector<8xf32> to vector<8x1xf32>
    %21 = arith.mulf %4, %4 : vector<8x128xf32>
    %cst_9 = arith.constant dense<0.000000e+00> : vector<8xf32>
    %22 = vector.multi_reduction <add>, %21, %cst_9 [1] : vector<8x128xf32> to vector<8xf32>
    %23 = vector.shape_cast %22 : vector<8xf32> to vector<8x1xf32>
    %24 = arith.mulf %5, %5 : vector<8x128xf32>
    %cst_10 = arith.constant dense<0.000000e+00> : vector<8xf32>
    %25 = vector.multi_reduction <add>, %24, %cst_10 [1] : vector<8x128xf32> to vector<8xf32>
    %26 = vector.shape_cast %25 : vector<8xf32> to vector<8x1xf32>
    %cst_11 = arith.constant 9.99999996E-13 : f32
    %27 = vector.broadcast %cst_11 : f32 to vector<8x1xf32>
    %28 = arith.maximumf %23, %27 : vector<8x1xf32>
    %29 = math.rsqrt %28 : vector<8x1xf32>
    %cst_12 = arith.constant 9.99999996E-13 : f32
    %30 = vector.broadcast %cst_12 : f32 to vector<8x1xf32>
    %31 = arith.maximumf %20, %30 : vector<8x1xf32>
    %32 = math.rsqrt %31 : vector<8x1xf32>
    %33 = arith.mulf %14, %32 : vector<8x1xf32>
    %34 = arith.mulf %33, %29 : vector<8x1xf32>
    %cst_13 = arith.constant 9.99999996E-13 : f32
    %35 = vector.broadcast %cst_13 : f32 to vector<8x1xf32>
    %36 = arith.maximumf %26, %35 : vector<8x1xf32>
    %37 = math.rsqrt %36 : vector<8x1xf32>
    %38 = arith.mulf %17, %37 : vector<8x1xf32>
    %39 = arith.mulf %38, %29 : vector<8x1xf32>
    %cst_14 = arith.constant 1.000000e+00 : f32
    %40 = vector.broadcast %cst_14 : f32 to vector<8x1xf32>
    %41 = arith.subf %40, %34 : vector<8x1xf32>
    %cst_15 = arith.constant 1.000000e+00 : f32
    %42 = vector.broadcast %cst_15 : f32 to vector<8x1xf32>
    %43 = arith.subf %42, %39 : vector<8x1xf32>
    %44 = arith.mulf %41, %41 : vector<8x1xf32>
    %45 = arith.mulf %43, %43 : vector<8x1xf32>
    %cst_16 = arith.constant 2.000000e-01 : f32
    %46 = vector.broadcast %cst_16 : f32 to vector<8x1xf32>
    %47 = arith.subf %46, %45 : vector<8x1xf32>
    %cst_17 = arith.constant 0.000000e+00 : f32
    %48 = vector.broadcast %cst_17 : f32 to vector<8x1xf32>
    %49 = arith.maximumf %47, %48 : vector<8x1xf32>
    %c0_18 = arith.constant 0 : index
    %c0_19 = arith.constant 0 : index
    %50 = vector.load %arg5[%c0_18, %c0_19] : memref<1x1xf32, #tpu.memory_space<vmem>>, vector<1x1xf32>
    %cst_20 = arith.constant 0.000000e+00 : f32
    %51 = vector.broadcast %cst_20 : f32 to vector<8x1xf32>
    %52 = arith.select %11, %44, %51 : vector<8x1xi1>, vector<8x1xf32>
    %53 = vector.shape_cast %52 : vector<8x1xf32> to vector<1x8x1xf32>
    %cst_21 = arith.constant dense<0.000000e+00> : vector<1xf32>
    %54 = vector.multi_reduction <add>, %53, %cst_21 [1, 2] : vector<1x8x1xf32> to vector<1xf32>
    %55 = vector.shape_cast %54 : vector<1xf32> to vector<1x1x1xf32>
    %56 = vector.extract %55[0, 0, 0] : f32 from vector<1x1x1xf32>
    %57 = vector.broadcast %56 : f32 to vector<1x1xf32>
    %58 = arith.addf %50, %57 : vector<1x1xf32>
    %c0_22 = arith.constant 0 : index
    %c0_23 = arith.constant 0 : index
    %59 = vector.load %arg5[%c0_22, %c0_23] : memref<1x1xf32, #tpu.memory_space<vmem>>, vector<1x1xf32>
    tpu.vector_store %arg5[%c0_22, %c0_23], %58 {strides = array<i32>} : memref<1x1xf32, #tpu.memory_space<vmem>>, vector<1x1xf32>,
    %c0_24 = arith.constant 0 : index
    %c0_25 = arith.constant 0 : index
    %60 = vector.load %arg6[%c0_24, %c0_25] : memref<1x1xf32, #tpu.memory_space<vmem>>, vector<1x1xf32>
    %cst_26 = arith.constant 0.000000e+00 : f32
    %61 = vector.broadcast %cst_26 : f32 to vector<8x1xf32>
    %62 = arith.select %11, %49, %61 : vector<8x1xi1>, vector<8x1xf32>
    %63 = vector.shape_cast %62 : vector<8x1xf32> to vector<1x8x1xf32>
    %cst_27 = arith.constant dense<0.000000e+00> : vector<1xf32>
    %64 = vector.multi_reduction <add>, %63, %cst_27 [1, 2] : vector<1x8x1xf32> to vector<1xf32>
    %65 = vector.shape_cast %64 : vector<1xf32> to vector<1x1x1xf32>
    %66 = vector.extract %65[0, 0, 0] : f32 from vector<1x1x1xf32>
    %67 = vector.broadcast %66 : f32 to vector<1x1xf32>
    %68 = arith.addf %60, %67 : vector<1x1xf32>
    %c0_28 = arith.constant 0 : index
    %c0_29 = arith.constant 0 : index
    %69 = vector.load %arg6[%c0_28, %c0_29] : memref<1x1xf32, #tpu.memory_space<vmem>>, vector<1x1xf32>
    tpu.vector_store %arg6[%c0_28, %c0_29], %68 {strides = array<i32>} : memref<1x1xf32, #tpu.memory_space<vmem>>, vector<1x1xf32>,
    %c0_i32_30 = arith.constant 0 : i32
    %70 = arith.cmpi eq, %arg0, %c0_i32_30 : i32
    %71 = arith.extui %70 : i1 to i32
    %c0_i32_31 = arith.constant 0 : i32
    %72 = arith.cmpi ne, %71, %c0_i32_31 : i32
    scf.if %72 {
      %c0_32 = arith.constant 0 : index
      %c0_33 = arith.constant 0 : index
      %73 = vector.load %arg5[%c0_32, %c0_33] : memref<1x1xf32, #tpu.memory_space<vmem>>, vector<1x1xf32>
      %c0_34 = arith.constant 0 : index
      %c0_35 = arith.constant 0 : index
      %74 = vector.load %arg6[%c0_34, %c0_35] : memref<1x1xf32, #tpu.memory_space<vmem>>, vector<1x1xf32>
      %75 = arith.addf %73, %74 : vector<1x1xf32>
      %cst_36 = arith.constant 6.250000e-02 : f32
      %76 = vector.broadcast %cst_36 : f32 to vector<1x1xf32>
      %77 = arith.mulf %75, %76 : vector<1x1xf32>
      %c0_37 = arith.constant 0 : index
      %c0_38 = arith.constant 0 : index
      %78 = vector.load %arg4[%c0_37, %c0_38] : memref<1x1xf32, #tpu.memory_space<vmem>>, vector<1x1xf32>
      tpu.vector_store %arg4[%c0_37, %c0_38], %77 {strides = array<i32>} : memref<1x1xf32, #tpu.memory_space<vmem>>, vector<1x1xf32>,
    } else {
    }
    return
  }
  func.func @transform_0(%arg0: i32) -> (i32, i32) {
    %c0_i32 = arith.constant 0 : i32
    %c0_i32_0 = arith.constant 0 : i32
    return %arg0, %c0_i32 : i32, i32
  }
  func.func @transform_1(%arg0: i32) -> (i32, i32) {
    %c0_i32 = arith.constant 0 : i32
    %c0_i32_0 = arith.constant 0 : i32
    return %arg0, %c0_i32 : i32, i32
  }
  func.func @transform_2(%arg0: i32) -> (i32, i32) {
    %c0_i32 = arith.constant 0 : i32
    %c0_i32_0 = arith.constant 0 : i32
    return %arg0, %c0_i32 : i32, i32
  }
  func.func @transform_3(%arg0: i32) -> (i32, i32) {
    %c0_i32 = arith.constant 0 : i32
    %c0_i32_0 = arith.constant 0 : i32
    %c0_i32_1 = arith.constant 0 : i32
    return %c0_i32, %c0_i32_0 : i32, i32
  }
}

</mosaic_0001>

<llo_original>
// kernel: tpu_custom_call.1
$region0: #{tpu_custom_call.1}
  #allocation0 [shape = 'u32[]', space=smem, size = 0x4, offset = 0x4, fixed_abs, tag = 'smem constant byte address 0x4 - core index']
  #allocation1 [shape = 'u32[144,128]{1,0:T(1,128)}', space=vmem, size = 0x12000, scoped, tag = 'internal scratch']
  #allocation2 [shape = 'f32[1,1]{1,0:T(1,128)}', space=vmem, size = 0x200, scoped, tag = 'scratch operand']
  #allocation3 [shape = 'f32[1,1]{1,0:T(1,128)}', space=vmem, size = 0x200, scoped, tag = 'scratch operand']
  %s0 = inlined_call_operand.hbm [shape: f32[8,128], index: 0, kind: input, shape index: {}]
  %s1 = inlined_call_operand.hbm [shape: f32[8,128], index: 1, kind: input, shape index: {}]
  %s2 = inlined_call_operand.hbm [shape: f32[8,128], index: 2, kind: input, shape index: {}]
  %s3 = inlined_call_operand.hbm [shape: f32[1,1], index: 3, kind: output, shape index: {}]
  %s4 = sld [smem:[#allocation0]]
  $region42: #{tpu_custom_call.1} parent=0
    _
  %s6 = ssub.s32 1, %s4
  %s7 = scalar_select 0, %s6, %s4
  $region1: #{tpu_custom_call.1} parent=0
    #allocation4 [shape = 'u8[4096]{0}', space=vmem, size = 0x1000, scoped, tag = 'input window, operand 0, single buffered']
    #allocation5 [shape = 's32[1]{0}', space=sflag, size = 0x4, scoped, tag = 'scoped memory for tpu_custom_call.1']
    #allocation6 [shape = 's32[1]{0}', space=sflag, size = 0x4, scoped, tag = 'scoped memory for tpu_custom_call.1']
    #allocation7 [shape = 'u8[4096]{0}', space=vmem, size = 0x1000, scoped, tag = 'input window, operand 1, single buffered']
    #allocation8 [shape = 's32[1]{0}', space=sflag, size = 0x4, scoped, tag = 'scoped memory for tpu_custom_call.1']
    #allocation9 [shape = 'u8[4096]{0}', space=vmem, size = 0x1000, scoped, tag = 'input window, operand 2, single buffered']
    #allocation10 [shape = 'u8[512]{0}', space=vmem, size = 0x400, scoped, tag = 'output window, operand 0, single buffered']
    %8 = vsyncpa [#allocation5], 0
    %9 = vsyncpa [#allocation8], 0
    %10 = vsyncpa [#allocation6], 0
    // Predicated region
    $region2: #{tpu_custom_call.1} parent=1 // pred_check
      _
    $region3: #{tpu_custom_call.1} parent=1 // pred_check_branch
      %12 = sbr.rel (0) target = $region5
    $region4: #{tpu_custom_call.1} parent=1 // pred_region
      %s14 = ssub.s32 128, 128
      %15 = vsyncadd [#allocation5], %s14
      %s17 = sshll.u32 [#allocation4], 4
      %s18 = int_to_ptr.vmem [resolvable:$true] %s17
      %20 = dma.hbm_to_vmem [thread:$0]  %s0, 128, %s18, [#allocation5]
    $region5: #{tpu_custom_call.1} parent=1 // pred_fallthru
      _
    // Predicated region
    $region6: #{tpu_custom_call.1} parent=1 // pred_check
      _
    $region7: #{tpu_custom_call.1} parent=1 // pred_check_branch
      %22 = sbr.rel (0) target = $region9
    $region8: #{tpu_custom_call.1} parent=1 // pred_region
      %s24 = ssub.s32 128, 128
      %25 = vsyncadd [#allocation8], %s24
      %s27 = sshll.u32 [#allocation7], 4
      %s28 = int_to_ptr.vmem [resolvable:$true] %s27
      %30 = dma.hbm_to_vmem [thread:$0]  %s1, 128, %s28, [#allocation8]
    $region9: #{tpu_custom_call.1} parent=1 // pred_fallthru
      _
    // Predicated region
    $region10: #{tpu_custom_call.1} parent=1 // pred_check
      _
    $region11: #{tpu_custom_call.1} parent=1 // pred_check_branch
      %32 = sbr.rel (0) target = $region13
    $region12: #{tpu_custom_call.1} parent=1 // pred_region
      %s34 = ssub.s32 128, 128
      %35 = vsyncadd [#allocation8], %s34
      %s37 = sshll.u32 [#allocation9], 4
      %s38 = int_to_ptr.vmem [resolvable:$true] %s37
      %40 = dma.hbm_to_vmem [thread:$0]  %s2, 128, %s38, [#allocation8]
    $region13: #{tpu_custom_call.1} parent=1 // pred_fallthru
      _
    // Predicated region
    $region14: #{tpu_custom_call.1} parent=1 // pred_check
      _
    $region15: #{tpu_custom_call.1} parent=1 // pred_check_branch
      %42 = sbr.rel (0) target = $region17
    $region16: #{tpu_custom_call.1} parent=1 // pred_region
      %43 = dma.done [#allocation5], 128
    $region17: #{tpu_custom_call.1} parent=1 // pred_fallthru
      _
    // Predicated region
    $region18: #{tpu_custom_call.1} parent=1 // pred_check
      _
    $region19: #{tpu_custom_call.1} parent=1 // pred_check_branch
      %45 = sbr.rel (0) target = $region21
    $region20: #{tpu_custom_call.1} parent=1 // pred_region
      %46 = dma.done [#allocation8], 128
    $region21: #{tpu_custom_call.1} parent=1 // pred_fallthru
      _
    // Predicated region
    $region22: #{tpu_custom_call.1} parent=1 // pred_check
      _
    $region23: #{tpu_custom_call.1} parent=1 // pred_check_branch
      %48 = sbr.rel (0) target = $region25
    $region24: #{tpu_custom_call.1} parent=1 // pred_region
      %49 = dma.done [#allocation8], 128
    $region25: #{tpu_custom_call.1} parent=1 // pred_fallthru
      _
    %p50 = scmp.eq.s32.totalorder 0, 0
    // Predicated region
    $region26: #{tpu_custom_call.1} parent=1 // pred_check
      %p51 = pneg %p50
    $region27: #{tpu_custom_call.1} parent=1 // pred_check_branch
      %53 = sbr.rel (%p51) target = $region29
    $region28: #{tpu_custom_call.1} parent=1 // pred_region
      %vm54 = vcmask 0
      %55 = vst.msk [vmem:[#allocation2] sm:$0x1] %vm54, 0.0
      %56 = vst.msk [vmem:[#allocation3] sm:$0x1] %vm54, 0.0
    $region29: #{tpu_custom_call.1} parent=1 // pred_fallthru
      _
    %v57 = vld [vmem:[#allocation4] sm:$0xff]
    %v58 = vld [vmem:[#allocation7] sm:$0xff]
    %v59 = vld [vmem:[#allocation9] sm:$0xff]
    %s60 = smul.u32 0, 8
    %v61 = vlaneseq
    %v62 = vshrl.u32 %v61, 7
    %v63 = vstv %s60
    %v64 = vadd.s32 %v63, %v62
    %vm65 = vcmp.lt.s32.totalorder %v64, 8
    %v66 = vmul.f32 %v57, %v58
    %67 = vadd.xlane.f32.xlu0 %v66
    %v68 = vpop.xlane.xlu0 %67
    %v69 = vmul.f32 %v59, %v58
    %70 = vadd.xlane.f32.xlu0 %v69
    %v71 = vpop.xlane.xlu0 %70
    %v72 = vmul.f32 %v57, %v57
    %73 = vadd.xlane.f32.xlu0 %v72
    %v74 = vpop.xlane.xlu0 %73
    %v75 = vmul.f32 %v58, %v58
    %76 = vadd.xlane.f32.xlu0 %v75
    %v77 = vpop.xlane.xlu0 %76
    %v78 = vmul.f32 %v59, %v59
    %79 = vadd.xlane.f32.xlu0 %v78
    %v80 = vpop.xlane.xlu0 %79
    %v81 = vmax.f32 %v77, 1e-12
    %v82 = vrsqrt.pop %v81
    %v83 = vmax.f32 %v74, 1e-12
    %v84 = vrsqrt.pop %v83
    %v85 = vmul.f32 %v68, %v84
    %v86 = vmul.f32 %v85, %v82
    %v87 = vmax.f32 %v80, 1e-12
    %v88 = vrsqrt.pop %v87
    %v89 = vmul.f32 %v71, %v88
    %v90 = vmul.f32 %v89, %v82
    %v91 = vsub.f32 1.0, %v86
    %v92 = vsub.f32 1.0, %v90
    %v93 = vmul.f32 %v91, %v91
    %v94 = vmul.f32 %v92, %v92
    %v95 = vsub.f32 0.2, %v94
    %v96 = vmax.f32 %v95, 0.0
    %v97 = vld [vmem:[#allocation2] sm:$0x1]
    %v98 = vsel %vm65, %v93, 0.0
    %vm99 = vcmask 7168
    %v100 = vsel %vm99, %v98, 0.0
    %101 = vadd.xlane.f32.xlu0 %v100
    %v102 = vpop.xlane.xlu0 %101
    %v103 = vrot.slane %v102, 4
    %v104 = vadd.f32 %v102, %v103
    %v105 = vrot.slane %v104, 2
    %v106 = vadd.f32 %v104, %v105
    %v107 = vrot.slane %v106, 1
    %v108 = vadd.f32 %v106, %v107
    %s109 = vtos %v108
    %v110 = vstv %s109
    %v111 = vadd.f32 %v97, %v110
    %vm112 = vcmask 0
    %113 = vst.msk [vmem:[#allocation2] sm:$0x1] %vm112, %v111
    %v114 = vld [vmem:[#allocation3] sm:$0x1]
    %v115 = vsel %vm65, %v96, 0.0
    %v116 = vsel %vm99, %v115, 0.0
    %117 = vadd.xlane.f32.xlu0 %v116
    %v118 = vpop.xlane.xlu0 %117
    %v119 = vrot.slane %v118, 4
    %v120 = vadd.f32 %v118, %v119
    %v121 = vrot.slane %v120, 2
    %v122 = vadd.f32 %v120, %v121
    %v123 = vrot.slane %v122, 1
    %v124 = vadd.f32 %v122, %v123
    %s125 = vtos %v124
    %v126 = vstv %s125
    %v127 = vadd.f32 %v114, %v126
    %128 = vst.msk [vmem:[#allocation3] sm:$0x1] %vm112, %v127
    // Predicated region
    $region30: #{tpu_custom_call.1} parent=1 // pred_check
      %p129 = pneg %p50
    $region31: #{tpu_custom_call.1} parent=1 // pred_check_branch
      %131 = sbr.rel (%p129) target = $region33
    $region32: #{tpu_custom_call.1} parent=1 // pred_region
      %v132 = vld [vmem:[#allocation2] sm:$0x1]
      %v133 = vld [vmem:[#allocation3] sm:$0x1]
      %v134 = vadd.f32 %v132, %v133
      %v135 = vmul.f32 %v134, 0.0625
      %136 = vst.msk [vmem:[#allocation10] sm:$0x1] %vm112, %v135
    $region33: #{tpu_custom_call.1} parent=1 // pred_fallthru
      _
    // Predicated region
    $region34: #{tpu_custom_call.1} parent=1 // pred_check
      _
    $region35: #{tpu_custom_call.1} parent=1 // pred_check_branch
      %138 = sbr.rel (0) target = $region37
    $region36: #{tpu_custom_call.1} parent=1 // pred_region
      %s140 = ssub.s32 16, 16
      %141 = vsyncadd [#allocation6], %s140
      %s143 = sshll.u32 [#allocation10], 4
      %s144 = int_to_ptr.vmem [resolvable:$true] %s143
      %146 = dma.vmem_to_hbm [thread:$0]  %s144, 16, %s3, [#allocation6]
    $region37: #{tpu_custom_call.1} parent=1 // pred_fallthru
      _
    // Predicated region
    $region38: #{tpu_custom_call.1} parent=1 // pred_check
      _
    $region39: #{tpu_custom_call.1} parent=1 // pred_check_branch
      %148 = sbr.rel (0) target = $region41
    $region40: #{tpu_custom_call.1} parent=1 // pred_region
      %149 = dma.done [#allocation6], 16
    $region41: #{tpu_custom_call.1} parent=1 // pred_fallthru
      _
    %150 = vsyncpa [#allocation5], 1
    %151 = vsyncpa [#allocation8], 1
    %152 = vsyncpa [#allocation6], 1

</llo_original>
